<compile_context>
chip_gen: v6e
topology: v6e:2x2x1
jax: 0.10.0
libtpu: 0.0.40
codegen_flags: <defaults>
</compile_context>

<pallas_src>
import functools

import jax
import jax.numpy as jnp
from jax.experimental import pallas as pl
from jax.experimental.pallas import tpu as pltpu


_LANE = 128


def _default_red_fn(a, b):
    return a + b


def _reduce_kernel(*refs, red_fn):
    """refs = (in_ref_0, ..., in_ref_{k-1}, out_ref).

    Pairwise (tree) reduction of all input tiles into the output tile.
    Shortens the VALU dependency chain vs. a serial fold; assumes red_fn is
    associative (true of the module default, addition).
    """
    *in_refs, out_ref = refs
    vals = [r[...] for r in in_refs]
    while len(vals) > 1:
        nxt = [red_fn(vals[i], vals[i + 1]) for i in range(0, len(vals) - 1, 2)]
        if len(vals) % 2:
            nxt.append(vals[-1])
        vals = nxt
    out_ref[...] = vals[0]


def _vmem_capacity_bytes():
    """Physical VMEM per TensorCore; conservative fallback (v7x = 64 MiB)."""
    try:
        info = pltpu.get_tpu_info()
        cap = getattr(info, "vmem_capacity_bytes", None)
        if cap:
            return int(cap)
    except Exception:
        pass
    return 64 * 1024 * 1024


def _reduce_slabs(slabs, *, red_fn, rows, dtype, itemsize, pipeline_budget,
                  vmem_cap, max_block_rows, alias_first):
    """One pallas_call reducing len(slabs) (rows, 128) slabs elementwise."""
    n = len(slabs)
    sub = max(8, 32 // itemsize)          # sublane multiple for this dtype

    # --- Tile-size selection (generation aware) ---------------------------
    # Pallas double-buffers every input and the output per grid step:
    #   VMEM/step ~= 2 * (n + 1) * tile_r * 128 * itemsize
    tile_r = pipeline_budget // (2 * (n + 1) * _LANE * itemsize)
    # ~4 MiB per input block: keeps the fixed ~0.35 us/step overhead well
    # under 10% of a step even on v7x's ~3.2 TB/s HBM.
    tile_r = min(tile_r, (4 << 20) // (_LANE * itemsize))
    if max_block_rows is not None:
        tile_r = min(tile_r, max_block_rows)
    tile_r = min(tile_r, rows)
    tile_r = max(sub, (tile_r // sub) * sub)

    needed = 2 * (n + 1) * tile_r * _LANE * itemsize
    vmem_limit = int(min(vmem_cap, max(32 << 20, needed + (8 << 20))))

    block = pl.BlockSpec((tile_r, _LANE), lambda i: (i, 0))
    grid = (pl.cdiv(rows, tile_r),)

    kwargs = {}
    if alias_first:
        # Input 0 is the carried accumulator from a previous pass (owned by
        # us) -> safe to alias with the output; each step reads its block
        # before writing the same block index.
        kwargs["input_output_aliases"] = {0: 0}

    # TODO(synk): optionally try pipeline_mode=pl.Buffered(3) on the input
    # BlockSpecs if xprof shows exposed DMA-start gaps on v7x.
    return pl.pallas_call(
        functools.partial(_reduce_kernel, red_fn=red_fn),
        out_shape=jax.ShapeDtypeStruct((rows, _LANE), dtype),
        grid_spec=pltpu.PrefetchScalarGridSpec(
            num_scalar_prefetch=0,
            grid=grid,
            in_specs=[block] * n,
            out_specs=block,
        ),
        compiler_params=pltpu.CompilerParams(
            # Rows may shard across both TensorCores on v7x.
            # TODO(synk): if profiling shows an idle TC on v7x, switch to an
            # explicit core_map / CORE_PARALLEL split of the row grid.
            dimension_semantics=("parallel",),
            vmem_limit_bytes=vmem_limit,
        ),
        **kwargs,
    )(*slabs)


def convergent_paths(inputs, red_fn=_default_red_fn, *,
                     min_kernel_elems=1 << 16, max_block_rows=None,
                     max_fan_in=None):
    """JAX/Pallas equivalent of ConvergentPaths(red_fn).forward(inputs).

    `inputs`: sequence of arrays with identical shape & dtype.
    `red_fn` must be an elementwise, shape/dtype-preserving, associative
    binary op (the module default is addition).  Reduction happens in the
    native dtype, matching the PyTorch reference.
    """
    inputs = list(inputs)
    assert len(inputs) >= 1
    shape = inputs[0].shape
    dtype = inputs[0].dtype
    for x in inputs[1:]:
        assert x.shape == shape and x.dtype == dtype

    n = len(inputs)
    if n == 1:
        return inputs[0]

    total = 1
    for d in shape:
        total *= d

    itemsize = jnp.dtype(dtype).itemsize
    sub = max(8, 32 // itemsize)

    # Small-size bypass: for tiny activations the pallas_call launch overhead
    # exceeds the whole reduction; XLA's fused elementwise op is optimal.
    if total < max(min_kernel_elems, sub * _LANE):
        return functools.reduce(red_fn, inputs)

    # --- VMEM / fan-in budgeting (generation aware) -----------------------
    vmem_cap = _vmem_capacity_bytes()
    # Keep the double-buffered pipeline within ~half of physical VMEM:
    # ~56 MiB on 128 MiB parts (v5e/v6e), 32 MiB on v7x (64 MiB/TC).
    pipeline_budget = min(vmem_cap // 2, 56 << 20)
    # Keep every operand block >= ~2 MiB (HBM roofline); wider fan-in is
    # handled with chunked accumulator passes instead of shrinking blocks.
    min_block_bytes = 2 << 20
    fan_in_cap = max(2, pipeline_budget // (2 * min_block_bytes) - 1)
    if max_fan_in is not None:
        fan_in_cap = max(2, min(fan_in_cap, max_fan_in))

    # --- Lane-dense slabs, no padding copies -------------------------------
    # Aligned prefix (multiple of 128 elems) goes through the kernel; the
    # tiny (<128 elem) tail is reduced with a plain fused XLA add.
    aligned_total = (total // _LANE) * _LANE
    rows = aligned_total // _LANE

    flats = [x.reshape(-1) for x in inputs]
    # TODO(synk): verify the prefix slice stays zero-copy on all generations
    # (or fuse it into the pallas operands via allow_input_fusion).
    slabs = [f[:aligned_total].reshape(rows, _LANE) for f in flats]

    reduce_call = functools.partial(
        _reduce_slabs, red_fn=red_fn, rows=rows, dtype=dtype,
        itemsize=itemsize, pipeline_budget=pipeline_budget, vmem_cap=vmem_cap,
        max_block_rows=max_block_rows)

    # --- Chunked accumulator reduction for wide fan-in ---------------------
    if n <= fan_in_cap:
        out = reduce_call(slabs, alias_first=False)
    else:
        out = reduce_call(slabs[:fan_in_cap], alias_first=False)
        pos = fan_in_cap
        while pos < n:
            chunk = slabs[pos:pos + (fan_in_cap - 1)]
            out = reduce_call([out] + chunk, alias_first=True)
            pos += len(chunk)

    out_flat = out.reshape(-1)
    if aligned_total != total:
        tail = functools.reduce(red_fn, [f[aligned_total:] for f in flats])
        out_flat = jnp.concatenate([out_flat, tail])
    return out_flat.reshape(shape)


if __name__ == "__main__":
    key = jax.random.PRNGKey(0)
    k_a, k_b, k_c = jax.random.split(key, 3)

    # Case 1: small NCHW activations (2, 4, 16, 16), 3 convergent paths.
    # Force the kernel path (min_kernel_elems=0) and a small block
    # (max_block_rows=8) so the multi-step tiled pipeline is exercised even
    # at this demo size.
    shape = (2, 4, 16, 16)
    num_paths = 3
    keys = jax.random.split(k_a, num_paths)
    inputs = [jax.random.normal(k, shape, dtype=jnp.float32) for k in keys]
    ref = functools.reduce(lambda a, b: a + b, inputs)

    out = convergent_paths(inputs, min_kernel_elems=0, max_block_rows=8)
    out = jax.block_until_ready(out)
    assert out.shape == shape and out.dtype == ref.dtype
    assert jnp.allclose(out, ref, atol=1e-5, rtol=1e-5)

    # Case 2: element count not a multiple of 128 -> aligned-prefix kernel
    # (with a partial last block) + fused XLA tail; no pad / slice copies.
    shape2 = (2, 3, 15, 17)  # 1530 elements -> 1408 aligned + 122 tail
    keys2 = jax.random.split(k_b, 4)
    inputs2 = [jax.random.normal(k, shape2, dtype=jnp.float32) for k in keys2]
    ref2 = functools.reduce(lambda a, b: a + b, inputs2)
    out2 = jax.block_until_ready(
        convergent_paths(inputs2, min_kernel_elems=0, max_block_rows=8))
    assert out2.shape == shape2
    assert jnp.allclose(out2, ref2, atol=1e-5, rtol=1e-5)

    # Case 3: wide fan-in -> chunked accumulator passes (forced small chunk,
    # exercises the carried-accumulator / input_output_aliases path).
    num_wide = 20
    keys3 = jax.random.split(k_c, num_wide)
    inputs3 = [jax.random.normal(k, shape, dtype=jnp.float32) for k in keys3]
    ref3 = functools.reduce(lambda a, b: a + b, inputs3)
    out3 = jax.block_until_ready(
        convergent_paths(inputs3, min_kernel_elems=0, max_fan_in=6))
    assert jnp.allclose(out3, ref3, atol=1e-4, rtol=1e-5)

    # Case 4: default small-size bypass (plain fused XLA add).
    out4 = jax.block_until_ready(convergent_paths(inputs))
    assert jnp.allclose(out4, ref, atol=1e-5, rtol=1e-5)

    print("KERNEL_OK")
</pallas_src>

<mosaic_0001>
module attributes {stable_mosaic.version = 11 : i64} {
  func.func @_reduce_kernel(%arg0: i32, %arg1: memref<8x128xf32, #tpu.memory_space<vmem>>, %arg2: memref<8x128xf32, #tpu.memory_space<vmem>>, %arg3: memref<8x128xf32, #tpu.memory_space<vmem>>, %arg4: memref<8x128xf32, #tpu.memory_space<vmem>>) attributes {dimension_semantics = [#tpu.dimension_semantics<parallel>], iteration_bounds = array<i64: 2>, scalar_prefetch = 0 : i64, scratch_operands = 0 : i64, tpu.core_type = #tpu.core_type<tc>, window_params = [{transform_indices = @transform_0, window_bounds = array<i64: 8, 128>}, {transform_indices = @transform_1, window_bounds = array<i64: 8, 128>}, {transform_indices = @transform_2, window_bounds = array<i64: 8, 128>}, {transform_indices = @transform_3, window_bounds = array<i64: 8, 128>}]} {
    %c0 = arith.constant 0 : index
    %c0_0 = arith.constant 0 : index
    %0 = vector.load %arg1[%c0, %c0_0] : memref<8x128xf32, #tpu.memory_space<vmem>>, vector<8x128xf32>
    %c0_1 = arith.constant 0 : index
    %c0_2 = arith.constant 0 : index
    %1 = vector.load %arg2[%c0_1, %c0_2] : memref<8x128xf32, #tpu.memory_space<vmem>>, vector<8x128xf32>
    %c0_3 = arith.constant 0 : index
    %c0_4 = arith.constant 0 : index
    %2 = vector.load %arg3[%c0_3, %c0_4] : memref<8x128xf32, #tpu.memory_space<vmem>>, vector<8x128xf32>
    %3 = arith.addf %0, %1 : vector<8x128xf32>
    %4 = arith.addf %3, %2 : vector<8x128xf32>
    %c0_5 = arith.constant 0 : index
    %c0_6 = arith.constant 0 : index
    %5 = vector.load %arg4[%c0_5, %c0_6] : memref<8x128xf32, #tpu.memory_space<vmem>>, vector<8x128xf32>
    tpu.vector_store %arg4[%c0_5, %c0_6], %4 {strides = array<i32>} : memref<8x128xf32, #tpu.memory_space<vmem>>, vector<8x128xf32>,
    return
  }
  func.func @transform_0(%arg0: i32) -> (i32, i32) {
    %c0_i32 = arith.constant 0 : i32
    %c0_i32_0 = arith.constant 0 : i32
    return %arg0, %c0_i32 : i32, i32
  }
  func.func @transform_1(%arg0: i32) -> (i32, i32) {
    %c0_i32 = arith.constant 0 : i32
    %c0_i32_0 = arith.constant 0 : i32
    return %arg0, %c0_i32 : i32, i32
  }
  func.func @transform_2(%arg0: i32) -> (i32, i32) {
    %c0_i32 = arith.constant 0 : i32
    %c0_i32_0 = arith.constant 0 : i32
    return %arg0, %c0_i32 : i32, i32
  }
  func.func @transform_3(%arg0: i32) -> (i32, i32) {
    %c0_i32 = arith.constant 0 : i32
    %c0_i32_0 = arith.constant 0 : i32
    return %arg0, %c0_i32 : i32, i32
  }
}

</mosaic_0001>

<llo_original>
// kernel: tpu_custom_call.1
$region0: #{tpu_custom_call.1}
  #allocation0 [shape = 'u32[]', space=smem, size = 0x4, offset = 0x4, fixed_abs, tag = 'smem constant byte address 0x4 - core index']
  #allocation1 [shape = 'u32[144,128]{1,0:T(1,128)}', space=vmem, size = 0x12000, scoped, tag = 'internal scratch']
  %s0 = inlined_call_operand.hbm [shape: f32[16,128], index: 0, kind: input, shape index: {}]
  %s1 = inlined_call_operand.hbm [shape: f32[16,128], index: 1, kind: input, shape index: {}]
  %s2 = inlined_call_operand.hbm [shape: f32[16,128], index: 2, kind: input, shape index: {}]
  %s3 = inlined_call_operand.hbm [shape: f32[16,128], index: 3, kind: output, shape index: {}]
  %s4 = sld [smem:[#allocation0]]
  $region57: #{tpu_custom_call.1} parent=0
    _
  %s6 = ssub.s32 1, %s4
  %s7 = scalar_select 0, %s6, %s4
  $region1: #{tpu_custom_call.1} parent=0
    #allocation2 [shape = 'u8[8192]{0}', space=vmem, size = 0x2000, scoped, tag = 'input window, operand 0']
    #allocation3 [shape = 's32[2]{0}', space=sflag, size = 0x8, scoped, tag = 'scoped memory for tpu_custom_call.1']
    #allocation4 [shape = 's32[2]{0}', space=sflag, size = 0x8, scoped, tag = 'scoped memory for tpu_custom_call.1']
    #allocation5 [shape = 'u8[8192]{0}', space=vmem, size = 0x2000, scoped, tag = 'input window, operand 1']
    #allocation6 [shape = 's32[2]{0}', space=sflag, size = 0x8, scoped, tag = 'scoped memory for tpu_custom_call.1']
    #allocation7 [shape = 'u8[8192]{0}', space=vmem, size = 0x2000, scoped, tag = 'input window, operand 2']
    #allocation8 [shape = 'u8[8192]{0}', space=vmem, size = 0x2000, scoped, tag = 'output window, operand 0']
    %8 = vsyncpa [#allocation3], 0
    %s9 = scalar_lea.sflag [#allocation3], 1
    %10 = vsyncpa %s9, 0
    %11 = vsyncpa [#allocation6], 0
    %s12 = scalar_lea.sflag [#allocation6], 1
    %13 = vsyncpa %s12, 0
    %14 = vsyncpa [#allocation4], 0
    %s15 = scalar_lea.sflag [#allocation4], 1
    %16 = vsyncpa %s15, 0
    loop: start=0, step=1, limit=4
    $region2: #{tpu_custom_call.1} parent=1 // loop_pre_header
      _
    $region3: #{tpu_custom_call.1} parent=1 // loop_header
      %s18 = sphi 0, %s22
      %p19 = scmp.ge.s32.totalorder %s18, 4
      %s28 = sphi 0, %s30
      %s31 = sphi 0, %s28
      %s32 = sphi 0, %s31
      %s48 = sphi 0, %s32
      %s54 = sphi 0, %s56
      %s57 = sphi 0, %s54
      %s58 = sphi 0, %s57
      %s74 = sphi 0, %s58
      %s80 = sphi 0, %s82
      %s83 = sphi 0, %s80
      %s84 = sphi 0, %s83
      %s100 = sphi 0, %s84
      %s106 = sphi 0, %s108
      %s109 = sphi 0, %s106
      %s110 = sphi 0, %s109
      %s126 = sphi 0, %s110
    $region4: #{tpu_custom_call.1} parent=1 // loop_header_branch
      %21 = sbr.rel (%p19) target = $region8
    $region5: #{tpu_custom_call.1} parent=1 // loop_body
      %s23 = ssub.s32 %s18, 1
      %s24 = ssub.s32 %s18, 2
      %s25 = sadd.s32 %s18, 1
      %s26 = ssub.s32 %s18, %s25
      %p27 = scmp.eq.s32.totalorder %s26, 0
      %s29 = sadd.s32 %s28, 1
      %s30 = scalar_select %p27, %s28, %s29
      %p33 = pneg %p27
      %p34 = scmp.eq.s32.totalorder %s18, 1
      %p35 = por %p33, %p34
      %p36 = scmp.ne.s32.totalorder %s28, %s31
      %p37 = scmp.eq.s32.totalorder %s18, 0
      %p38 = por %p36, %p37
      %p39 = scmp.ne.s32.totalorder %s28, %s31
      %p40 = scmp.eq.s32.totalorder %s23, 1
      %p41 = por %p39, %p40
      %p42 = scmp.ne.s32.totalorder %s31, %s32
      %p43 = scmp.eq.s32.totalorder %s23, 0
      %p44 = por %p42, %p43
      %p45 = scmp.ne.s32.totalorder %s31, %s32
      %p46 = scmp.eq.s32.totalorder %s24, 1
      %p47 = por %p45, %p46
      %p49 = scmp.ne.s32.totalorder %s32, %s48
      %p50 = scmp.eq.s32.totalorder %s24, 0
      %p51 = por %p49, %p50
      %s52 = ssub.s32 %s18, %s25
      %p53 = scmp.eq.s32.totalorder %s52, 0
      %s55 = sadd.s32 %s54, 1
      %s56 = scalar_select %p53, %s54, %s55
      %p59 = pneg %p53
      %p60 = scmp.eq.s32.totalorder %s18, 1
      %p61 = por %p59, %p60
      %p62 = scmp.ne.s32.totalorder %s54, %s57
      %p63 = scmp.eq.s32.totalorder %s18, 0
      %p64 = por %p62, %p63
      %p65 = scmp.ne.s32.totalorder %s54, %s57
      %p66 = scmp.eq.s32.totalorder %s23, 1
      %p67 = por %p65, %p66
      %p68 = scmp.ne.s32.totalorder %s57, %s58
      %p69 = scmp.eq.s32.totalorder %s23, 0
      %p70 = por %p68, %p69
      %p71 = scmp.ne.s32.totalorder %s57, %s58
      %p72 = scmp.eq.s32.totalorder %s24, 1
      %p73 = por %p71, %p72
      %p75 = scmp.ne.s32.totalorder %s58, %s74
      %p76 = scmp.eq.s32.totalorder %s24, 0
      %p77 = por %p75, %p76
      %s78 = ssub.s32 %s18, %s25
      %p79 = scmp.eq.s32.totalorder %s78, 0
      %s81 = sadd.s32 %s80, 1
      %s82 = scalar_select %p79, %s80, %s81
      %p85 = pneg %p79
      %p86 = scmp.eq.s32.totalorder %s18, 1
      %p87 = por %p85, %p86
      %p88 = scmp.ne.s32.totalorder %s80, %s83
      %p89 = scmp.eq.s32.totalorder %s18, 0
      %p90 = por %p88, %p89
      %p91 = scmp.ne.s32.totalorder %s80, %s83
      %p92 = scmp.eq.s32.totalorder %s23, 1
      %p93 = por %p91, %p92
      %p94 = scmp.ne.s32.totalorder %s83, %s84
      %p95 = scmp.eq.s32.totalorder %s23, 0
      %p96 = por %p94, %p95
      %p97 = scmp.ne.s32.totalorder %s83, %s84
      %p98 = scmp.eq.s32.totalorder %s24, 1
      %p99 = por %p97, %p98
      %p101 = scmp.ne.s32.totalorder %s84, %s100
      %p102 = scmp.eq.s32.totalorder %s24, 0
      %p103 = por %p101, %p102
      %s104 = ssub.s32 %s18, %s25
      %p105 = scmp.eq.s32.totalorder %s104, 0
      %s107 = sadd.s32 %s106, 1
      %s108 = scalar_select %p105, %s106, %s107
      %p111 = pneg %p105
      %p112 = scmp.eq.s32.totalorder %s18, 1
      %p113 = por %p111, %p112
      %p114 = scmp.ne.s32.totalorder %s106, %s109
      %p115 = scmp.eq.s32.totalorder %s18, 0
      %p116 = por %p114, %p115
      %p117 = scmp.ne.s32.totalorder %s106, %s109
      %p118 = scmp.eq.s32.totalorder %s23, 1
      %p119 = por %p117, %p118
      %p120 = scmp.ne.s32.totalorder %s109, %s110
      %p121 = scmp.eq.s32.totalorder %s23, 0
      %p122 = por %p120, %p121
      %p123 = scmp.ne.s32.totalorder %s109, %s110
      %p124 = scmp.eq.s32.totalorder %s24, 1
      %p125 = por %p123, %p124
      %p127 = scmp.ne.s32.totalorder %s110, %s126
      %p128 = scmp.eq.s32.totalorder %s24, 0
      %p129 = por %p127, %p128
      %p130 = scmp.le.s32.totalorder 1, %s18
      %p131 = scmp.lt.s32.totalorder %s18, 3
      %p132 = pnand %p130, %p131
      %p133 = pneg %p132
      // Predicated region
      $region9: #{tpu_custom_call.1} parent=5 // pred_check
        _
      $region10: #{tpu_custom_call.1} parent=5 // pred_check_branch
        %135 = sbr.rel (%p132) target = $region12
      $region11: #{tpu_custom_call.1} parent=5 // pred_region
        %s136 = ssub.s32 %s18, 1
      $region12: #{tpu_custom_call.1} parent=5 // pred_fallthru
        _
      %p137 = scmp.lt.s32.totalorder %s18, 2
      // Predicated region
      $region13: #{tpu_custom_call.1} parent=5 // pred_check
        %p138 = pneg %p137
      $region14: #{tpu_custom_call.1} parent=5 // pred_check_branch
        %140 = sbr.rel (%p138) target = $region16
      $region15: #{tpu_custom_call.1} parent=5 // pred_region
        // Predicated region
        $region17: #{tpu_custom_call.1} parent=15 // pred_check
          %p141 = pneg %p38
        $region18: #{tpu_custom_call.1} parent=15 // pred_check_branch
          %143 = sbr.rel (%p141) target = $region20
        $region19: #{tpu_custom_call.1} parent=15 // pred_region
          %s144 = sand.u32 %s28, 1
          %s145 = scalar_lea.sflag [#allocation3], %s144
          %s146 = sand.u32 %s28, 1
          %s147 = smul.addr %s146, 8
          %s148 = scalar_lea.vmem [#allocation2], %s147
          %s150 = ssub.s32 128, 128
          %151 = vsyncadd %s145, %s150
          %s152 = smul.addr %s18, 128
          %s153 = scalar_lea.hbm %s0, %s152
          %s155 = sshll.u32 %s148, 4
          %s156 = int_to_ptr.vmem [resolvable:$true] %s155
          %158 = dma.hbm_to_vmem [thread:$0]  %s153, 128, %s156, %s145
        $region20: #{tpu_custom_call.1} parent=15 // pred_fallthru
          _
        // Predicated region
        $region21: #{tpu_custom_call.1} parent=15 // pred_check
          %p159 = pneg %p64
        $region22: #{tpu_custom_call.1} parent=15 // pred_check_branch
          %161 = sbr.rel (%p159) target = $region24
        $region23: #{tpu_custom_call.1} parent=15 // pred_region
          %s162 = sand.u32 %s18, 1
          %s163 = scalar_lea.sflag [#allocation6], %s162
          %s164 = sand.u32 %s54, 1
          %s165 = smul.addr %s164, 8
          %s166 = scalar_lea.vmem [#allocation5], %s165
          %s168 = ssub.s32 128, 128
          %169 = vsyncadd %s163, %s168
          %s170 = smul.addr %s18, 128
          %s171 = scalar_lea.hbm %s1, %s170
          %s173 = sshll.u32 %s166, 4
          %s174 = int_to_ptr.vmem [resolvable:$true] %s173
          %176 = dma.hbm_to_vmem [thread:$0]  %s171, 128, %s174, %s163
        $region24: #{tpu_custom_call.1} parent=15 // pred_fallthru
          _
        // Predicated region
        $region25: #{tpu_custom_call.1} parent=15 // pred_check
          %p177 = pneg %p90
        $region26: #{tpu_custom_call.1} parent=15 // pred_check_branch
          %179 = sbr.rel (%p177) target = $region28
        $region27: #{tpu_custom_call.1} parent=15 // pred_region
          %s180 = sand.u32 %s18, 1
          %s181 = scalar_lea.sflag [#allocation6], %s180
          %s182 = sand.u32 %s80, 1
          %s183 = smul.addr %s182, 8
          %s184 = scalar_lea.vmem [#allocation7], %s183
          %s186 = ssub.s32 128, 128
          %187 = vsyncadd %s181, %s186
          %s188 = smul.addr %s18, 128
          %s189 = scalar_lea.hbm %s2, %s188
          %s191 = sshll.u32 %s184, 4
          %s192 = int_to_ptr.vmem [resolvable:$true] %s191
          %194 = dma.hbm_to_vmem [thread:$0]  %s189, 128, %s192, %s181
        $region28: #{tpu_custom_call.1} parent=15 // pred_fallthru
          _
      $region16: #{tpu_custom_call.1} parent=5 // pred_fallthru
        _
      %p195 = scmp.le.s32.totalorder 1, %s18
      %p196 = scmp.lt.s32.totalorder %s18, 3
      %p197 = pnand %p195, %p196
      %p198 = pneg %p197
      // Predicated region
      $region29: #{tpu_custom_call.1} parent=5 // pred_check
        _
      $region30: #{tpu_custom_call.1} parent=5 // pred_check_branch
        %200 = sbr.rel (%p197) target = $region32
      $region31: #{tpu_custom_call.1} parent=5 // pred_region
        %s201 = ssub.s32 %s18, 1
        %s202 = sand.u32 %s31, 1
        %s203 = scalar_lea.sflag [#allocation3], %s202
        %s204 = sand.u32 %s31, 1
        %s205 = smul.addr %s204, 8
        %s206 = scalar_lea.vmem [#allocation2], %s205
        // Predicated region
        $region33: #{tpu_custom_call.1} parent=31 // pred_check
          %p207 = pneg %p44
        $region34: #{tpu_custom_call.1} parent=31 // pred_check_branch
          %209 = sbr.rel (%p207) target = $region36
        $region35: #{tpu_custom_call.1} parent=31 // pred_region
          %210 = dma.done %s203, 128
        $region36: #{tpu_custom_call.1} parent=31 // pred_fallthru
          _
        %s211 = sand.u32 %s23, 1
        %s212 = scalar_lea.sflag [#allocation6], %s211
        %s213 = sand.u32 %s57, 1
        %s214 = smul.addr %s213, 8
        %s215 = scalar_lea.vmem [#allocation5], %s214
        // Predicated region
        $region37: #{tpu_custom_call.1} parent=31 // pred_check
          %p216 = pneg %p70
        $region38: #{tpu_custom_call.1} parent=31 // pred_check_branch
          %218 = sbr.rel (%p216) target = $region40
        $region39: #{tpu_custom_call.1} parent=31 // pred_region
          %219 = dma.done %s212, 128
        $region40: #{tpu_custom_call.1} parent=31 // pred_fallthru
          _
        %s220 = sand.u32 %s23, 1
        %s221 = scalar_lea.sflag [#allocation6], %s220
        %s222 = sand.u32 %s83, 1
        %s223 = smul.addr %s222, 8
        %s224 = scalar_lea.vmem [#allocation7], %s223
        // Predicated region
        $region41: #{tpu_custom_call.1} parent=31 // pred_check
          %p225 = pneg %p96
        $region42: #{tpu_custom_call.1} parent=31 // pred_check_branch
          %227 = sbr.rel (%p225) target = $region44
        $region43: #{tpu_custom_call.1} parent=31 // pred_region
          %228 = dma.done %s221, 128
        $region44: #{tpu_custom_call.1} parent=31 // pred_fallthru
          _
        %s229 = sand.u32 %s31, 1
        %s230 = scalar_lea.sflag [#allocation3], %s229
        %s231 = sand.u32 %s31, 1
        %s232 = smul.addr %s231, 8
        %s233 = scalar_lea.vmem [#allocation2], %s232
        %p234 = pneg %p44
        %p235 = pneg %p41
        %s236 = sand.u32 %s23, 1
        %s237 = scalar_lea.sflag [#allocation6], %s236
        %s238 = sand.u32 %s57, 1
        %s239 = smul.addr %s238, 8
        %s240 = scalar_lea.vmem [#allocation5], %s239
        %p241 = pneg %p70
        %p242 = pneg %p67
        %s243 = sand.u32 %s23, 1
        %s244 = scalar_lea.sflag [#allocation6], %s243
        %s245 = sand.u32 %s83, 1
        %s246 = smul.addr %s245, 8
        %s247 = scalar_lea.vmem [#allocation7], %s246
        %p248 = pneg %p96
        %p249 = pneg %p93
        %p250 = pneg %p122
        %p251 = pneg %p119
        %s252 = sand.u32 %s109, 1
        %s253 = scalar_lea.sflag [#allocation4], %s252
        %s254 = sand.u32 %s109, 1
        %s255 = smul.addr %s254, 8
        %s256 = scalar_lea.vmem [#allocation8], %s255
        %v257 = vld [vmem:[%s206] sm:$0xff]
        %v258 = vld [vmem:[%s215] sm:$0xff]
        %v259 = vld [vmem:[%s224] sm:$0xff]
        %v260 = vadd.f32 %v257, %v258
        %v261 = vadd.f32 %v260, %v259
        %262 = vst [vmem:[%s256] sm:$0xff] %v261
        %s263 = sand.u32 %s109, 1
        %s264 = scalar_lea.sflag [#allocation4], %s263
        %s265 = sand.u32 %s109, 1
        %s266 = smul.addr %s265, 8
        %s267 = scalar_lea.vmem [#allocation8], %s266
        // Predicated region
        $region45: #{tpu_custom_call.1} parent=31 // pred_check
          %p268 = pneg %p119
        $region46: #{tpu_custom_call.1} parent=31 // pred_check_branch
          %270 = sbr.rel (%p268) target = $region48
        $region47: #{tpu_custom_call.1} parent=31 // pred_region
          %s272 = ssub.s32 128, 128
          %273 = vsyncadd %s264, %s272
          %s274 = smul.addr %s23, 128
          %s275 = scalar_lea.hbm %s3, %s274
          %s277 = sshll.u32 %s267, 4
          %s278 = int_to_ptr.vmem [resolvable:$true] %s277
          %280 = dma.vmem_to_hbm [thread:$0]  %s278, 128, %s275, %s264
        $region48: #{tpu_custom_call.1} parent=31 // pred_fallthru
          _
      $region32: #{tpu_custom_call.1} parent=5 // pred_fallthru
        _
      %p281 = scmp.le.s32.totalorder 2, %s18
      // Predicated region
      $region49: #{tpu_custom_call.1} parent=5 // pred_check
        %p282 = pneg %p281
      $region50: #{tpu_custom_call.1} parent=5 // pred_check_branch
        %284 = sbr.rel (%p282) target = $region52
      $region51: #{tpu_custom_call.1} parent=5 // pred_region
        %s285 = ssub.s32 %s18, 2
        // Predicated region
        $region53: #{tpu_custom_call.1} parent=51 // pred_check
          %p286 = pneg %p125
        $region54: #{tpu_custom_call.1} parent=51 // pred_check_branch
          %288 = sbr.rel (%p286) target = $region56
        $region55: #{tpu_custom_call.1} parent=51 // pred_region
          %s289 = sand.u32 %s110, 1
          %s290 = scalar_lea.sflag [#allocation4], %s289
          %s291 = sand.u32 %s110, 1
          %s292 = smul.addr %s291, 8
          %s293 = scalar_lea.vmem [#allocation8], %s292
          %294 = dma.done %s290, 128
        $region56: #{tpu_custom_call.1} parent=51 // pred_fallthru
          _
      $region52: #{tpu_custom_call.1} parent=5 // pred_fallthru
        _
    $region6: #{tpu_custom_call.1} parent=1 // loop_footer
      %s22 = sadd.s32 1, %s18
    $region7: #{tpu_custom_call.1} parent=1 // loop_footer_branch
      %17 = sbr.rel target = $region3
    $region8: #{tpu_custom_call.1} parent=1 // loop_exit
      _
    %295 = vsyncpa [#allocation3], 1
    %s296 = scalar_lea.sflag [#allocation3], 1
    %297 = vsyncpa %s296, 1
    %298 = vsyncpa [#allocation6], 1
    %s299 = scalar_lea.sflag [#allocation6], 1
    %300 = vsyncpa %s299, 1
    %301 = vsyncpa [#allocation4], 1
    %s302 = scalar_lea.sflag [#allocation4], 1
    %303 = vsyncpa %s302, 1

</llo_original>
